<compile_context>
chip_gen: v7x
topology: tpu7x:2x2x1
jax: 0.10.0
libtpu: 0.0.40
codegen_flags: <defaults>
</compile_context>

<pallas_src>
import jax
import jax.numpy as jnp
from jax.experimental import pallas as pl
from jax.experimental.pallas import tpu as pltpu


LANE = 128     # TPU lane width: pad feature dims so stores are unmasked vst
TILE_N = 128   # node-axis tile (multiple of the bf16 sublane tile of 16)


# ----------------------------- Pallas kernel ---------------------------------
def _cfg_node_encoder_kernel(expr_ref, kind_ref, w1_ref, w2_ref, b2_ref, out_ref):
    # layer 1: h = expr @ W1_expr + (kind_emb @ W1_kind + b_proj)
    #          (the K=8 contraction + bias is pre-folded into kind_ref)
    h = jnp.dot(expr_ref[...], w1_ref[...], preferred_element_type=jnp.float32)
    h = h + kind_ref[...]
    # dropout(p=0.3) in eval mode == identity
    # additional linear layer: relu(h @ W2 + b2); trailing dropout == identity
    h2 = jnp.dot(h.astype(jnp.bfloat16), w2_ref[...],
                 preferred_element_type=jnp.float32) + b2_ref[...]
    out_ref[...] = jnp.maximum(h2, 0.0)


def _pad2d(x, rows, cols):
    r, c = x.shape
    return jnp.pad(x, ((0, rows - r), (0, cols - c)))


def cfg_node_encoder_pallas(expr_enc, kind_contrib, w1_expr, w2, b2, *,
                            tile_n=TILE_N):
    """expr_enc: (N, E) f32, kind_contrib: (N, D) f32 (= emb@W1_kind + b1)
    -> (N, D) f32."""
    n, e = expr_enc.shape
    d = w2.shape[1]
    e_pad = pl.cdiv(e, LANE) * LANE
    d_pad = pl.cdiv(d, LANE) * LANE
    n_pad = pl.cdiv(n, tile_n) * tile_n

    # lane-dense, zero-padded operands; bf16 on the MXU path, f32 addends.
    expr_p = _pad2d(expr_enc, n_pad, e_pad).astype(jnp.bfloat16)
    kind_p = _pad2d(kind_contrib, n_pad, d_pad).astype(jnp.float32)
    w1_p = _pad2d(w1_expr, e_pad, d_pad).astype(jnp.bfloat16)
    w2_p = _pad2d(w2, d_pad, d_pad).astype(jnp.bfloat16)
    b2_p = _pad2d(b2.reshape(1, -1), 1, d_pad).astype(jnp.float32)

    grid = (n_pad // tile_n,)
    flops = 2 * n_pad * d_pad * (e_pad + d_pad)
    bytes_accessed = (expr_p.size * 2 + kind_p.size * 4 + w1_p.size * 2
                      + w2_p.size * 2 + b2_p.size * 4 + n_pad * d_pad * 4)

    out = pl.pallas_call(
        _cfg_node_encoder_kernel,
        out_shape=jax.ShapeDtypeStruct((n_pad, d_pad), jnp.float32),
        grid=grid,
        in_specs=[
            pl.BlockSpec((tile_n, e_pad), lambda i: (i, 0)),   # expr tile
            pl.BlockSpec((tile_n, d_pad), lambda i: (i, 0)),   # folded kind + b1 tile
            pl.BlockSpec((e_pad, d_pad), lambda i: (0, 0)),    # W1_expr (resident)
            pl.BlockSpec((d_pad, d_pad), lambda i: (0, 0)),    # W2      (resident)
            pl.BlockSpec((1, d_pad), lambda i: (0, 0)),        # b2      (resident)
        ],
        out_specs=pl.BlockSpec((tile_n, d_pad), lambda i: (i, 0)),
        compiler_params=pltpu.CompilerParams(
            dimension_semantics=("parallel",),
            vmem_limit_bytes=32 * 1024 * 1024),
        cost_estimate=pl.CostEstimate(flops=flops, transcendentals=0,
                                      bytes_accessed=bytes_accessed),
    )(expr_p, kind_p, w1_p, w2_p, b2_p)
    return out[:n, :d]


# ------------------------------ JAX glue --------------------------------------
def masked_scatter_rows(mask, source, expr_dim):
    """zeros(N, E).masked_scatter_(mask[:,None].expand(N,E), source):
    rows where mask is True receive consecutive rows of `source` in order."""
    n = mask.shape[0]
    src_idx = jnp.cumsum(mask.astype(jnp.int32)) - 1
    src_idx = jnp.clip(src_idx, 0, source.shape[0] - 1)
    gathered = jnp.take(source, src_idx, axis=0)
    return jnp.where(mask[:, None], gathered, jnp.zeros((n, expr_dim), source.dtype))


def cfg_node_encoder_forward(combined_cfg_expressions_encodings,
                             cfg_nodes_control_kind,
                             cfg_nodes_has_expression_mask,
                             params):
    emb_table = params["emb_table"]           # (V, K), padding row zeroed
    w1 = params["w_proj"]                     # (E + K, D)
    b1 = params["b_proj"]                     # (D,)
    w2 = params["w_add"]                      # (D, D)
    b2 = params["b_add"]                      # (D,)

    expr_dim = combined_cfg_expressions_encodings.shape[-1]

    # Fold the tiny (K=8) embedding matmul + projection bias into a (V, D)
    # lookup table; padding_idx row of emb_table is zero -> table row == b1,
    # exactly matching nn.Embedding(padding_idx) + Linear semantics.
    kind_proj_table = emb_table @ w1[expr_dim:, :] + b1[None, :]
    kind_contrib = jnp.take(kind_proj_table, cfg_nodes_control_kind, axis=0)

    # TODO(synk): the masked_scatter gather could be fused into the kernel via
    # PrefetchScalarGridSpec (scalar-prefetch src indices) to avoid one HBM
    # round trip of the (N, E) expression tensor at large N.
    expr_enc = masked_scatter_rows(cfg_nodes_has_expression_mask,
                                   combined_cfg_expressions_encodings, expr_dim)

    return cfg_node_encoder_pallas(expr_enc, kind_contrib,
                                   w1[:expr_dim, :], w2, b2)


# ------------------------------ reference -------------------------------------
def _reference(combined, kinds, mask, params):
    expr_dim = combined.shape[-1]
    kind_emb = jnp.take(params["emb_table"], kinds, axis=0)
    expr_enc = masked_scatter_rows(mask, combined, expr_dim)
    x = jnp.concatenate([expr_enc, kind_emb], axis=-1)
    h = x @ params["w_proj"] + params["b_proj"]
    h = jnp.maximum(h @ params["w_add"] + params["b_add"], 0.0)
    return h


# -------------------------------- main -----------------------------------------
if __name__ == "__main__":
    # module config (small, consistent with the forward pass)
    cfg_node_dim = 32
    cfg_combined_expression_dim = 32
    pdg_node_control_kinds_embedding_dim = 8
    vocab_size = 10
    pad_idx = 0
    n_cfg_nodes = 200          # nodes in batch (pads to 2 tiles of 128)
    n_with_expr = 120          # nodes that have an expression

    key = jax.random.PRNGKey(0)
    k_emb, k_w1, k_b1, k_w2, k_b2, k_x, k_kind, k_mask = jax.random.split(key, 8)

    in_dim = cfg_combined_expression_dim + pdg_node_control_kinds_embedding_dim
    emb_table = 0.1 * jax.random.normal(
        k_emb, (vocab_size, pdg_node_control_kinds_embedding_dim), jnp.float32)
    emb_table = emb_table.at[pad_idx].set(0.0)  # nn.Embedding padding_idx semantics

    params = {
        "emb_table": emb_table,
        "w_proj": 0.1 * jax.random.normal(k_w1, (in_dim, cfg_node_dim), jnp.float32),
        "b_proj": 0.1 * jax.random.normal(k_b1, (cfg_node_dim,), jnp.float32),
        "w_add": 0.1 * jax.random.normal(k_w2, (cfg_node_dim, cfg_node_dim), jnp.float32),
        "b_add": 0.1 * jax.random.normal(k_b2, (cfg_node_dim,), jnp.float32),
    }

    combined_cfg_expressions_encodings = jax.random.normal(
        k_x, (n_with_expr, cfg_combined_expression_dim), jnp.float32)
    cfg_nodes_control_kind = jax.random.randint(
        k_kind, (n_cfg_nodes,), 0, vocab_size, dtype=jnp.int32)
    # deterministic mask with exactly n_with_expr True entries
    perm = jax.random.permutation(k_mask, n_cfg_nodes)
    cfg_nodes_has_expression_mask = jnp.zeros((n_cfg_nodes,), jnp.bool_).at[
        perm[:n_with_expr]].set(True)

    out = cfg_node_encoder_forward(combined_cfg_expressions_encodings,
                                   cfg_nodes_control_kind,
                                   cfg_nodes_has_expression_mask,
                                   params)
    out = jax.block_until_ready(out)

    ref = _reference(combined_cfg_expressions_encodings, cfg_nodes_control_kind,
                     cfg_nodes_has_expression_mask, params)
    assert out.shape == (n_cfg_nodes, cfg_node_dim)
    # bf16 operands / f32 accumulation vs. the f32 reference -> loose tolerance
    assert jnp.allclose(out, ref, atol=2e-2, rtol=2e-2)

    # TODO(synk): dropout is treated as identity (eval mode); training-mode RNG
    # dropout would use pltpu.prng_seed / pltpu.stateful_bernoulli in-kernel.
    print("KERNEL_OK")
</pallas_src>

<mosaic_0001>
module attributes {stable_mosaic.version = 11 : i64} {
  func.func @_cfg_node_encoder_kernel(%arg0: i32, %arg1: memref<128x128xbf16, #tpu.memory_space<vmem>>, %arg2: memref<128x128xf32, #tpu.memory_space<vmem>>, %arg3: memref<128x128xbf16, #tpu.memory_space<vmem>>, %arg4: memref<128x128xbf16, #tpu.memory_space<vmem>>, %arg5: memref<1x128xf32, #tpu.memory_space<vmem>>, %arg6: memref<128x128xf32, #tpu.memory_space<vmem>>) attributes {dimension_semantics = [#tpu.dimension_semantics<parallel>], iteration_bounds = array<i64: 2>, scalar_prefetch = 0 : i64, scratch_operands = 0 : i64, tpu.core_type = #tpu.core_type<tc>, window_params = [{transform_indices = @transform_0, window_bounds = array<i64: 128, 128>}, {transform_indices = @transform_1, window_bounds = array<i64: 128, 128>}, {pipeline_mode = #tpu.pipeline_mode<synchronous>, transform_indices = @transform_2, window_bounds = array<i64: 128, 128>}, {pipeline_mode = #tpu.pipeline_mode<synchronous>, transform_indices = @transform_3, window_bounds = array<i64: 128, 128>}, {pipeline_mode = #tpu.pipeline_mode<synchronous>, transform_indices = @transform_4, window_bounds = array<i64: 1, 128>}, {transform_indices = @transform_5, window_bounds = array<i64: 128, 128>}]} {
    %c0 = arith.constant 0 : index
    %c0_0 = arith.constant 0 : index
    %0 = vector.load %arg1[%c0, %c0_0] : memref<128x128xbf16, #tpu.memory_space<vmem>>, vector<128x128xbf16>
    %c0_1 = arith.constant 0 : index
    %c0_2 = arith.constant 0 : index
    %1 = vector.load %arg3[%c0_1, %c0_2] : memref<128x128xbf16, #tpu.memory_space<vmem>>, vector<128x128xbf16>
    %cst = arith.constant dense<0.000000e+00> : vector<128x128xf32>
    %2 = tpu.matmul %0, %1, %cst {dimension_numbers = #tpu.dot_dimension_numbers<[1], [0], [0], [1], [0, 0, 1, 1], [], []>} : vector<128x128xbf16>, vector<128x128xbf16>, vector<128x128xf32> -> vector<128x128xf32>
    %c0_3 = arith.constant 0 : index
    %c0_4 = arith.constant 0 : index
    %3 = vector.load %arg2[%c0_3, %c0_4] : memref<128x128xf32, #tpu.memory_space<vmem>>, vector<128x128xf32>
    %4 = arith.addf %2, %3 : vector<128x128xf32>
    %5 = arith.truncf %4 : vector<128x128xf32> to vector<128x128xbf16>
    %c0_5 = arith.constant 0 : index
    %c0_6 = arith.constant 0 : index
    %6 = vector.load %arg4[%c0_5, %c0_6] : memref<128x128xbf16, #tpu.memory_space<vmem>>, vector<128x128xbf16>
    %cst_7 = arith.constant dense<0.000000e+00> : vector<128x128xf32>
    %7 = tpu.matmul %5, %6, %cst_7 {dimension_numbers = #tpu.dot_dimension_numbers<[1], [0], [0], [1], [0, 0, 1, 1], [], []>} : vector<128x128xbf16>, vector<128x128xbf16>, vector<128x128xf32> -> vector<128x128xf32>
    %c0_8 = arith.constant 0 : index
    %c0_9 = arith.constant 0 : index
    %8 = vector.load %arg5[%c0_8, %c0_9] : memref<1x128xf32, #tpu.memory_space<vmem>>, vector<1x128xf32>
    %9 = vector.broadcast %8 : vector<1x128xf32> to vector<128x128xf32>
    %10 = arith.addf %7, %9 : vector<128x128xf32>
    %cst_10 = arith.constant 0.000000e+00 : f32
    %11 = vector.broadcast %cst_10 : f32 to vector<128x128xf32>
    %12 = arith.maximumf %10, %11 : vector<128x128xf32>
    %c0_11 = arith.constant 0 : index
    %c0_12 = arith.constant 0 : index
    %13 = vector.load %arg6[%c0_11, %c0_12] : memref<128x128xf32, #tpu.memory_space<vmem>>, vector<128x128xf32>
    tpu.vector_store %arg6[%c0_11, %c0_12], %12 {strides = array<i32>} : memref<128x128xf32, #tpu.memory_space<vmem>>, vector<128x128xf32>,
    return
  }
  func.func @transform_0(%arg0: i32) -> (i32, i32) {
    %c0_i32 = arith.constant 0 : i32
    %c0_i32_0 = arith.constant 0 : i32
    return %arg0, %c0_i32 : i32, i32
  }
  func.func @transform_1(%arg0: i32) -> (i32, i32) {
    %c0_i32 = arith.constant 0 : i32
    %c0_i32_0 = arith.constant 0 : i32
    return %arg0, %c0_i32 : i32, i32
  }
  func.func @transform_2(%arg0: i32) -> (i32, i32) {
    %c0_i32 = arith.constant 0 : i32
    %c0_i32_0 = arith.constant 0 : i32
    %c0_i32_1 = arith.constant 0 : i32
    return %c0_i32, %c0_i32_0 : i32, i32
  }
  func.func @transform_3(%arg0: i32) -> (i32, i32) {
    %c0_i32 = arith.constant 0 : i32
    %c0_i32_0 = arith.constant 0 : i32
    %c0_i32_1 = arith.constant 0 : i32
    return %c0_i32, %c0_i32_0 : i32, i32
  }
  func.func @transform_4(%arg0: i32) -> (i32, i32) {
    %c0_i32 = arith.constant 0 : i32
    %c0_i32_0 = arith.constant 0 : i32
    %c0_i32_1 = arith.constant 0 : i32
    return %c0_i32, %c0_i32_0 : i32, i32
  }
  func.func @transform_5(%arg0: i32) -> (i32, i32) {
    %c0_i32 = arith.constant 0 : i32
    %c0_i32_0 = arith.constant 0 : i32
    return %arg0, %c0_i32 : i32, i32
  }
}

</mosaic_0001>

<llo_original>
// kernel: tpu_custom_call.1
$region0: #{tpu_custom_call.1}
  #allocation0 [shape = 'u32[]', space=smem, size = 0x4, offset = 0x4, fixed_abs, tag = 'smem constant byte address 0x4 - core index']
  #allocation1 [shape = 'u32[144,128]{1,0:T(1,128)}', space=vmem, size = 0x12000, scoped, tag = 'internal scratch']
  %s0 = inlined_call_operand.hbm [shape: bf16[256,128], index: 0, kind: input, shape index: {}]
  %s1 = inlined_call_operand.hbm [shape: f32[256,128], index: 1, kind: input, shape index: {}]
  %s2 = inlined_call_operand.hbm [shape: bf16[128,128], index: 2, kind: input, shape index: {}]
  %s3 = inlined_call_operand.hbm [shape: bf16[128,128], index: 3, kind: input, shape index: {}]
  %s4 = inlined_call_operand.vmem [shape: f32[1,128], index: 4, kind: input, shape index: {}]
  %s5 = inlined_call_operand.hbm [shape: f32[256,128], index: 5, kind: output, shape index: {}]
  %s6 = sld [smem:[#allocation0]]
  $region69: #{tpu_custom_call.1} parent=0
    _
  %s8 = ssub.s32 1, %s6
  %s9 = scalar_select 0, %s8, %s6
  $region1: #{tpu_custom_call.1} parent=0
    #allocation2 [shape = 'u8[65536]{0}', space=vmem, size = 0x10000, scoped, tag = 'input window, operand 0']
    #allocation3 [shape = 's32[2]{0}', space=sflag, size = 0x8, scoped, tag = 'scoped memory for tpu_custom_call.1']
    #allocation4 [shape = 's32[2]{0}', space=sflag, size = 0x8, scoped, tag = 'scoped memory for tpu_custom_call.1']
    #allocation5 [shape = 'u8[131072]{0}', space=vmem, size = 0x20000, scoped, tag = 'input window, operand 1']
    #allocation6 [shape = 's32[2]{0}', space=sflag, size = 0x8, scoped, tag = 'scoped memory for tpu_custom_call.1']
    #allocation7 [shape = 'u8[32768]{0}', space=vmem, size = 0x8000, scoped, tag = 'input window, operand 2, single buffered']
    #allocation8 [shape = 'u8[32768]{0}', space=vmem, size = 0x8000, scoped, tag = 'input window, operand 3, single buffered']
    #allocation9 [shape = 's32[1]{0}', space=sflag, size = 0x4, scoped, tag = 'scoped memory for tpu_custom_call.1']
    #allocation10 [shape = 'u8[131072]{0}', space=vmem, size = 0x20000, scoped, tag = 'output window, operand 0']
    %10 = vsyncpa [#allocation3], 0
    %s11 = scalar_lea.sflag [#allocation3], 1
    %12 = vsyncpa %s11, 0
    %13 = vsyncpa [#allocation6], 0
    %s14 = scalar_lea.sflag [#allocation6], 1
    %15 = vsyncpa %s14, 0
    %16 = vsyncpa [#allocation9], 0
    %17 = vsyncpa [#allocation4], 0
    %s18 = scalar_lea.sflag [#allocation4], 1
    %19 = vsyncpa %s18, 0
    loop: start=0, step=1, limit=4
    $region2: #{tpu_custom_call.1} parent=1 // loop_pre_header
      _
    $region3: #{tpu_custom_call.1} parent=1 // loop_header
      %s21 = sphi 0, %s25
      %p22 = scmp.ge.s32.totalorder %s21, 4
      %s31 = sphi 0, %s33
      %s34 = sphi 0, %s31
      %s35 = sphi 0, %s34
      %s51 = sphi 0, %s35
      %s57 = sphi 0, %s59
      %s60 = sphi 0, %s57
      %s61 = sphi 0, %s60
      %s77 = sphi 0, %s61
      %s81 = sphi 0, %s81
      %s83 = sphi 0, %s81
      %s84 = sphi 0, %s83
      %s98 = sphi 0, %s84
      %s102 = sphi 0, %s102
      %s104 = sphi 0, %s102
      %s105 = sphi 0, %s104
      %s119 = sphi 0, %s105
      %s123 = sphi 0, %s123
      %s125 = sphi 0, %s123
      %s126 = sphi 0, %s125
      %s140 = sphi 0, %s126
      %s146 = sphi 0, %s148
      %s149 = sphi 0, %s146
      %s150 = sphi 0, %s149
      %s166 = sphi 0, %s150
    $region4: #{tpu_custom_call.1} parent=1 // loop_header_branch
      %24 = sbr.rel (%p22) target = $region8
    $region5: #{tpu_custom_call.1} parent=1 // loop_body
      %s26 = ssub.s32 %s21, 1
      %s27 = ssub.s32 %s21, 2
      %s28 = sadd.s32 %s21, 1
      %s29 = ssub.s32 %s21, %s28
      %p30 = scmp.eq.s32.totalorder %s29, 0
      %s32 = sadd.s32 %s31, 1
      %s33 = scalar_select %p30, %s31, %s32
      %p36 = pneg %p30
      %p37 = scmp.eq.s32.totalorder %s21, 1
      %p38 = por %p36, %p37
      %p39 = scmp.ne.s32.totalorder %s31, %s34
      %p40 = scmp.eq.s32.totalorder %s21, 0
      %p41 = por %p39, %p40
      %p42 = scmp.ne.s32.totalorder %s31, %s34
      %p43 = scmp.eq.s32.totalorder %s26, 1
      %p44 = por %p42, %p43
      %p45 = scmp.ne.s32.totalorder %s34, %s35
      %p46 = scmp.eq.s32.totalorder %s26, 0
      %p47 = por %p45, %p46
      %p48 = scmp.ne.s32.totalorder %s34, %s35
      %p49 = scmp.eq.s32.totalorder %s27, 1
      %p50 = por %p48, %p49
      %p52 = scmp.ne.s32.totalorder %s35, %s51
      %p53 = scmp.eq.s32.totalorder %s27, 0
      %p54 = por %p52, %p53
      %s55 = ssub.s32 %s21, %s28
      %p56 = scmp.eq.s32.totalorder %s55, 0
      %s58 = sadd.s32 %s57, 1
      %s59 = scalar_select %p56, %s57, %s58
      %p62 = pneg %p56
      %p63 = scmp.eq.s32.totalorder %s21, 1
      %p64 = por %p62, %p63
      %p65 = scmp.ne.s32.totalorder %s57, %s60
      %p66 = scmp.eq.s32.totalorder %s21, 0
      %p67 = por %p65, %p66
      %p68 = scmp.ne.s32.totalorder %s57, %s60
      %p69 = scmp.eq.s32.totalorder %s26, 1
      %p70 = por %p68, %p69
      %p71 = scmp.ne.s32.totalorder %s60, %s61
      %p72 = scmp.eq.s32.totalorder %s26, 0
      %p73 = por %p71, %p72
      %p74 = scmp.ne.s32.totalorder %s60, %s61
      %p75 = scmp.eq.s32.totalorder %s27, 1
      %p76 = por %p74, %p75
      %p78 = scmp.ne.s32.totalorder %s61, %s77
      %p79 = scmp.eq.s32.totalorder %s27, 0
      %p80 = por %p78, %p79
      %s82 = sadd.s32 %s81, 1
      %p85 = scmp.eq.s32.totalorder %s21, 1
      %p86 = scmp.ne.s32.totalorder %s81, %s83
      %p87 = scmp.eq.s32.totalorder %s21, 0
      %p88 = por %p86, %p87
      %p89 = scmp.ne.s32.totalorder %s81, %s83
      %p90 = scmp.eq.s32.totalorder %s26, 1
      %p91 = por %p89, %p90
      %p92 = scmp.ne.s32.totalorder %s83, %s84
      %p93 = scmp.eq.s32.totalorder %s26, 0
      %p94 = por %p92, %p93
      %p95 = scmp.ne.s32.totalorder %s83, %s84
      %p96 = scmp.eq.s32.totalorder %s27, 1
      %p97 = por %p95, %p96
      %p99 = scmp.ne.s32.totalorder %s84, %s98
      %p100 = scmp.eq.s32.totalorder %s27, 0
      %p101 = por %p99, %p100
      %s103 = sadd.s32 %s102, 1
      %p106 = scmp.eq.s32.totalorder %s21, 1
      %p107 = scmp.ne.s32.totalorder %s102, %s104
      %p108 = scmp.eq.s32.totalorder %s21, 0
      %p109 = por %p107, %p108
      %p110 = scmp.ne.s32.totalorder %s102, %s104
      %p111 = scmp.eq.s32.totalorder %s26, 1
      %p112 = por %p110, %p111
      %p113 = scmp.ne.s32.totalorder %s104, %s105
      %p114 = scmp.eq.s32.totalorder %s26, 0
      %p115 = por %p113, %p114
      %p116 = scmp.ne.s32.totalorder %s104, %s105
      %p117 = scmp.eq.s32.totalorder %s27, 1
      %p118 = por %p116, %p117
      %p120 = scmp.ne.s32.totalorder %s105, %s119
      %p121 = scmp.eq.s32.totalorder %s27, 0
      %p122 = por %p120, %p121
      %s124 = sadd.s32 %s123, 1
      %p127 = scmp.eq.s32.totalorder %s21, 1
      %p128 = scmp.ne.s32.totalorder %s123, %s125
      %p129 = scmp.eq.s32.totalorder %s21, 0
      %p130 = por %p128, %p129
      %p131 = scmp.ne.s32.totalorder %s123, %s125
      %p132 = scmp.eq.s32.totalorder %s26, 1
      %p133 = por %p131, %p132
      %p134 = scmp.ne.s32.totalorder %s125, %s126
      %p135 = scmp.eq.s32.totalorder %s26, 0
      %p136 = por %p134, %p135
      %p137 = scmp.ne.s32.totalorder %s125, %s126
      %p138 = scmp.eq.s32.totalorder %s27, 1
      %p139 = por %p137, %p138
      %p141 = scmp.ne.s32.totalorder %s126, %s140
      %p142 = scmp.eq.s32.totalorder %s27, 0
      %p143 = por %p141, %p142
      %s144 = ssub.s32 %s21, %s28
      %p145 = scmp.eq.s32.totalorder %s144, 0
      %s147 = sadd.s32 %s146, 1
      %s148 = scalar_select %p145, %s146, %s147
      %p151 = pneg %p145
      %p152 = scmp.eq.s32.totalorder %s21, 1
      %p153 = por %p151, %p152
      %p154 = scmp.ne.s32.totalorder %s146, %s149
      %p155 = scmp.eq.s32.totalorder %s21, 0
      %p156 = por %p154, %p155
      %p157 = scmp.ne.s32.totalorder %s146, %s149
      %p158 = scmp.eq.s32.totalorder %s26, 1
      %p159 = por %p157, %p158
      %p160 = scmp.ne.s32.totalorder %s149, %s150
      %p161 = scmp.eq.s32.totalorder %s26, 0
      %p162 = por %p160, %p161
      %p163 = scmp.ne.s32.totalorder %s149, %s150
      %p164 = scmp.eq.s32.totalorder %s27, 1
      %p165 = por %p163, %p164
      %p167 = scmp.ne.s32.totalorder %s150, %s166
      %p168 = scmp.eq.s32.totalorder %s27, 0
      %p169 = por %p167, %p168
      %p170 = scmp.le.s32.totalorder 1, %s21
      %p171 = scmp.lt.s32.totalorder %s21, 3
      %p172 = pnand %p170, %p171
      %p173 = pneg %p172
      // Predicated region
      $region9: #{tpu_custom_call.1} parent=5 // pred_check
        _
      $region10: #{tpu_custom_call.1} parent=5 // pred_check_branch
        %175 = sbr.rel (%p172) target = $region12
      $region11: #{tpu_custom_call.1} parent=5 // pred_region
        %s176 = ssub.s32 %s21, 1
        // Predicated region
        $region13: #{tpu_custom_call.1} parent=11 // pred_check
          %p177 = pneg %p94
        $region14: #{tpu_custom_call.1} parent=11 // pred_check_branch
          %179 = sbr.rel (%p177) target = $region16
        $region15: #{tpu_custom_call.1} parent=11 // pred_region
          %s181 = ssub.s32 1024, 1024
          %182 = vsyncadd [#allocation6], %s181
          %s183 = sshll.u32 [#allocation7], 4
          %s184 = int_to_ptr.vmem [resolvable:$true] %s183
          %189 = dma.hbm_to_vmem [thread:$0]  %s2, 1024, %s184, [#allocation6], 64, 64, 4
        $region16: #{tpu_custom_call.1} parent=11 // pred_fallthru
          _
        // Predicated region
        $region17: #{tpu_custom_call.1} parent=11 // pred_check
          %p190 = pneg %p115
        $region18: #{tpu_custom_call.1} parent=11 // pred_check_branch
          %192 = sbr.rel (%p190) target = $region20
        $region19: #{tpu_custom_call.1} parent=11 // pred_region
          %s194 = ssub.s32 1024, 1024
          %195 = vsyncadd [#allocation9], %s194
          %s196 = sshll.u32 [#allocation8], 4
          %s197 = int_to_ptr.vmem [resolvable:$true] %s196
          %202 = dma.hbm_to_vmem [thread:$0]  %s3, 1024, %s197, [#allocation9], 64, 64, 4
        $region20: #{tpu_custom_call.1} parent=11 // pred_fallthru
          _
        // Predicated region
        $region21: #{tpu_custom_call.1} parent=11 // pred_check
          %p203 = pneg %p136
        $region22: #{tpu_custom_call.1} parent=11 // pred_check_branch
          %205 = sbr.rel (%p203) target = $region24
        $region23: #{tpu_custom_call.1} parent=11 // pred_region
          _
        $region24: #{tpu_custom_call.1} parent=11 // pred_fallthru
          _
      $region12: #{tpu_custom_call.1} parent=5 // pred_fallthru
        _
      %p206 = scmp.lt.s32.totalorder %s21, 2
      // Predicated region
      $region25: #{tpu_custom_call.1} parent=5 // pred_check
        %p207 = pneg %p206
      $region26: #{tpu_custom_call.1} parent=5 // pred_check_branch
        %209 = sbr.rel (%p207) target = $region28
      $region27: #{tpu_custom_call.1} parent=5 // pred_region
        // Predicated region
        $region29: #{tpu_custom_call.1} parent=27 // pred_check
          %p210 = pneg %p41
        $region30: #{tpu_custom_call.1} parent=27 // pred_check_branch
          %212 = sbr.rel (%p210) target = $region32
        $region31: #{tpu_custom_call.1} parent=27 // pred_region
          %s213 = sand.u32 %s31, 1
          %s214 = scalar_lea.sflag [#allocation3], %s213
          %s215 = sand.u32 %s31, 1
          %s216 = smul.addr %s215, 64
          %s217 = scalar_lea.vmem [#allocation2], %s216
          %s218 = smul.u32 16, %s21
          %s220 = ssub.s32 1024, 1024
          %221 = vsyncadd %s214, %s220
          %s222 = smul.addr %s218, 64
          %s223 = scalar_lea.hbm %s0, %s222
          %s224 = sshll.u32 %s217, 4
          %s225 = int_to_ptr.vmem [resolvable:$true] %s224
          %230 = dma.hbm_to_vmem [thread:$0]  %s223, 1024, %s225, %s214, 64, 64, 4
        $region32: #{tpu_custom_call.1} parent=27 // pred_fallthru
          _
        // Predicated region
        $region33: #{tpu_custom_call.1} parent=27 // pred_check
          %p231 = pneg %p67
        $region34: #{tpu_custom_call.1} parent=27 // pred_check_branch
          %233 = sbr.rel (%p231) target = $region36
        $region35: #{tpu_custom_call.1} parent=27 // pred_region
          %s234 = sand.u32 %s21, 1
          %s235 = scalar_lea.sflag [#allocation6], %s234
          %s236 = sand.u32 %s57, 1
          %s237 = smul.addr %s236, 128
          %s238 = scalar_lea.vmem [#allocation5], %s237
          %s239 = smul.u32 16, %s21
          %s241 = ssub.s32 2048, 2048
          %242 = vsyncadd %s235, %s241
          %s243 = smul.addr %s239, 128
          %s244 = scalar_lea.hbm %s1, %s243
          %s245 = sshll.u32 %s238, 4
          %s246 = int_to_ptr.vmem [resolvable:$true] %s245
          %251 = dma.hbm_to_vmem [thread:$0]  %s244, 2048, %s246, %s235, 128, 128, 8
        $region36: #{tpu_custom_call.1} parent=27 // pred_fallthru
          _
      $region28: #{tpu_custom_call.1} parent=5 // pred_fallthru
        _
      %p252 = scmp.le.s32.totalorder 1, %s21
      %p253 = scmp.lt.s32.totalorder %s21, 3
      %p254 = pnand %p252, %p253
      %p255 = pneg %p254
      // Predicated region
      $region37: #{tpu_custom_call.1} parent=5 // pred_check
        _
      $region38: #{tpu_custom_call.1} parent=5 // pred_check_branch
        %257 = sbr.rel (%p254) target = $region40
      $region39: #{tpu_custom_call.1} parent=5 // pred_region
        %s258 = ssub.s32 %s21, 1
        %s259 = sand.u32 %s34, 1
        %s260 = scalar_lea.sflag [#allocation3], %s259
        %s261 = sand.u32 %s34, 1
        %s262 = smul.addr %s261, 64
        %s263 = scalar_lea.vmem [#allocation2], %s262
        // Predicated region
        $region41: #{tpu_custom_call.1} parent=39 // pred_check
          %p264 = pneg %p47
        $region42: #{tpu_custom_call.1} parent=39 // pred_check_branch
          %266 = sbr.rel (%p264) target = $region44
        $region43: #{tpu_custom_call.1} parent=39 // pred_region
          %267 = dma.done %s260, 1024
        $region44: #{tpu_custom_call.1} parent=39 // pred_fallthru
          _
        %s268 = sand.u32 %s26, 1
        %s269 = scalar_lea.sflag [#allocation6], %s268
        %s270 = sand.u32 %s60, 1
        %s271 = smul.addr %s270, 128
        %s272 = scalar_lea.vmem [#allocation5], %s271
        // Predicated region
        $region45: #{tpu_custom_call.1} parent=39 // pred_check
          %p273 = pneg %p73
        $region46: #{tpu_custom_call.1} parent=39 // pred_check_branch
          %275 = sbr.rel (%p273) target = $region48
        $region47: #{tpu_custom_call.1} parent=39 // pred_region
          %276 = dma.done %s269, 2048
        $region48: #{tpu_custom_call.1} parent=39 // pred_fallthru
          _
        // Predicated region
        $region49: #{tpu_custom_call.1} parent=39 // pred_check
          %p277 = pneg %p94
        $region50: #{tpu_custom_call.1} parent=39 // pred_check_branch
          %279 = sbr.rel (%p277) target = $region52
        $region51: #{tpu_custom_call.1} parent=39 // pred_region
          %280 = dma.done [#allocation6], 1024
        $region52: #{tpu_custom_call.1} parent=39 // pred_fallthru
          _
        // Predicated region
        $region53: #{tpu_custom_call.1} parent=39 // pred_check
          %p281 = pneg %p115
        $region54: #{tpu_custom_call.1} parent=39 // pred_check_branch
          %283 = sbr.rel (%p281) target = $region56
        $region55: #{tpu_custom_call.1} parent=39 // pred_region
          %284 = dma.done [#allocation9], 1024
        $region56: #{tpu_custom_call.1} parent=39 // pred_fallthru
          _
        %s285 = sand.u32 %s34, 1
        %s286 = scalar_lea.sflag [#allocation3], %s285
        %s287 = sand.u32 %s34, 1
        %s288 = smul.addr %s287, 64
        %s289 = scalar_lea.vmem [#allocation2], %s288
        %p290 = pneg %p47
        %p291 = pneg %p44
        %s292 = sand.u32 %s26, 1
        %s293 = scalar_lea.sflag [#allocation6], %s292
        %s294 = sand.u32 %s60, 1
        %s295 = smul.addr %s294, 128
        %s296 = scalar_lea.vmem [#allocation5], %s295
        %p297 = pneg %p73
        %p298 = pneg %p70
        %p299 = pneg %p94
        %p300 = pneg %p91
        %p301 = pneg %p115
        %p302 = pneg %p112
        %p303 = pneg %p136
        %p304 = pneg %p133
        %p305 = pneg %p162
        %p306 = pneg %p159
        %s307 = sand.u32 %s149, 1
        %s308 = scalar_lea.sflag [#allocation4], %s307
        %s309 = sand.u32 %s149, 1
        %s310 = smul.addr %s309, 128
        %s311 = scalar_lea.vmem [#allocation10], %s310
        %s312 = smul.u32 16, %s26
        %s313 = smul.u32 16, %s26
        %s314 = smul.u32 16, %s26
        %v316 = vld [vmem:[%s263] sm:$0xf]
        %v317 = vld [vmem:[%s263 + $0x4] sm:$0xf]
        %v318 = vld [vmem:[%s263 + $0x8] sm:$0xf]
        %v319 = vld [vmem:[%s263 + $0xc] sm:$0xf]
        %v320 = vld [vmem:[%s263 + $0x10] sm:$0xf]
        %v321 = vld [vmem:[%s263 + $0x14] sm:$0xf]
        %v322 = vld [vmem:[%s263 + $0x18] sm:$0xf]
        %v323 = vld [vmem:[%s263 + $0x1c] sm:$0xf]
        %v324 = vld [vmem:[%s263 + $0x20] sm:$0xf]
        %v325 = vld [vmem:[%s263 + $0x24] sm:$0xf]
        %v326 = vld [vmem:[%s263 + $0x28] sm:$0xf]
        %v327 = vld [vmem:[%s263 + $0x2c] sm:$0xf]
        %v328 = vld [vmem:[%s263 + $0x30] sm:$0xf]
        %v329 = vld [vmem:[%s263 + $0x34] sm:$0xf]
        %v330 = vld [vmem:[%s263 + $0x38] sm:$0xf]
        %v331 = vld [vmem:[%s263 + $0x3c] sm:$0xf]
        %v332 = vld [vmem:[#allocation7] sm:$0xf]
        %v333 = vld [vmem:[#allocation7 + $0x4] sm:$0xf]
        %v334 = vld [vmem:[#allocation7 + $0x8] sm:$0xf]
        %v335 = vld [vmem:[#allocation7 + $0xc] sm:$0xf]
        %v336 = vld [vmem:[#allocation7 + $0x10] sm:$0xf]
        %v337 = vld [vmem:[#allocation7 + $0x14] sm:$0xf]
        %v338 = vld [vmem:[#allocation7 + $0x18] sm:$0xf]
        %v339 = vld [vmem:[#allocation7 + $0x1c] sm:$0xf]
        %v340 = vld [vmem:[#allocation7 + $0x20] sm:$0xf]
        %v341 = vld [vmem:[#allocation7 + $0x24] sm:$0xf]
        %v342 = vld [vmem:[#allocation7 + $0x28] sm:$0xf]
        %v343 = vld [vmem:[#allocation7 + $0x2c] sm:$0xf]
        %v344 = vld [vmem:[#allocation7 + $0x30] sm:$0xf]
        %v345 = vld [vmem:[#allocation7 + $0x34] sm:$0xf]
        %v346 = vld [vmem:[#allocation7 + $0x38] sm:$0xf]
        %v347 = vld [vmem:[#allocation7 + $0x3c] sm:$0xf]
        %v348 = vld [vmem:[%s272] sm:$0xff]
        %v349 = vld [vmem:[%s272 + $0x8] sm:$0xff]
        %v350 = vld [vmem:[%s272 + $0x10] sm:$0xff]
        %v351 = vld [vmem:[%s272 + $0x18] sm:$0xff]
        %v352 = vld [vmem:[%s272 + $0x20] sm:$0xff]
        %v353 = vld [vmem:[%s272 + $0x28] sm:$0xff]
        %v354 = vld [vmem:[%s272 + $0x30] sm:$0xff]
        %v355 = vld [vmem:[%s272 + $0x38] sm:$0xff]
        %v356 = vld [vmem:[%s272 + $0x40] sm:$0xff]
        %v357 = vld [vmem:[%s272 + $0x48] sm:$0xff]
        %v358 = vld [vmem:[%s272 + $0x50] sm:$0xff]
        %v359 = vld [vmem:[%s272 + $0x58] sm:$0xff]
        %v360 = vld [vmem:[%s272 + $0x60] sm:$0xff]
        %v361 = vld [vmem:[%s272 + $0x68] sm:$0xff]
        %v362 = vld [vmem:[%s272 + $0x70] sm:$0xff]
        %v363 = vld [vmem:[%s272 + $0x78] sm:$0xff]
        %v380 = vunpack.c.l.b16 %v316
        %v381 = vunpack.c.l.b16 %v317
        %v382 = vunpack.c.l.b16 %v318
        %v383 = vunpack.c.l.b16 %v319
        %v384 = vunpack.c.l.b16 %v320
        %v385 = vunpack.c.l.b16 %v321
        %v386 = vunpack.c.l.b16 %v322
        %v387 = vunpack.c.l.b16 %v323
        %v388 = vunpack.c.l.b16 %v324
        %v389 = vunpack.c.l.b16 %v325
        %v390 = vunpack.c.l.b16 %v326
        %v391 = vunpack.c.l.b16 %v327
        %v392 = vunpack.c.l.b16 %v328
        %v393 = vunpack.c.l.b16 %v329
        %v394 = vunpack.c.l.b16 %v330
        %v395 = vunpack.c.l.b16 %v331
        %v396 = vpack.c.b16 %v381, %v380
        %v397 = vpack.c.b16 %v383, %v382
        %v398 = vpack.c.b16 %v385, %v384
        %v399 = vpack.c.b16 %v387, %v386
        %v400 = vpack.c.b16 %v389, %v388
        %v401 = vpack.c.b16 %v391, %v390
        %v402 = vpack.c.b16 %v393, %v392
        %v403 = vpack.c.b16 %v395, %v394
        %v428 = vunpack.c.l.b16 %v332
        %v429 = vunpack.c.l.b16 %v333
        %v430 = vunpack.c.l.b16 %v334
        %v431 = vunpack.c.l.b16 %v335
        %v432 = vunpack.c.l.b16 %v336
        %v433 = vunpack.c.l.b16 %v337
        %v434 = vunpack.c.l.b16 %v338
        %v435 = vunpack.c.l.b16 %v339
        %v436 = vunpack.c.l.b16 %v340
        %v437 = vunpack.c.l.b16 %v341
        %v438 = vunpack.c.l.b16 %v342
        %v439 = vunpack.c.l.b16 %v343
        %v440 = vunpack.c.l.b16 %v344
        %v441 = vunpack.c.l.b16 %v345
        %v442 = vunpack.c.l.b16 %v346
        %v443 = vunpack.c.l.b16 %v347
        %v444 = vpack.c.b16 %v429, %v428
        %v445 = vpack.c.b16 %v431, %v430
        %v446 = vpack.c.b16 %v433, %v432
        %v447 = vpack.c.b16 %v435, %v434
        %v448 = vpack.c.b16 %v437, %v436
        %v449 = vpack.c.b16 %v439, %v438
        %v450 = vpack.c.b16 %v441, %v440
        %v451 = vpack.c.b16 %v443, %v442
        %460 = vmatprep.subr.bf16.mxu0 0
        %461 = vmatpush1.bf16.msra.mxu0 %v444
        %462 = vmatprep.subr.bf16.mxu0 0
        %463 = vmatpush1.bf16.msra.mxu0 %v445
        %464 = vmatprep.subr.bf16.mxu0 0
        %465 = vmatpush1.bf16.msra.mxu0 %v446
        %466 = vmatprep.subr.bf16.mxu0 0
        %467 = vmatpush1.bf16.msra.mxu0 %v447
        %468 = vmatprep.subr.bf16.mxu0 0
        %469 = vmatpush1.bf16.msra.mxu0 %v448
        %470 = vmatprep.subr.bf16.mxu0 0
        %471 = vmatpush1.bf16.msra.mxu0 %v449
        %472 = vmatprep.subr.bf16.mxu0 0
        %473 = vmatpush1.bf16.msra.mxu0 %v450
        %474 = vmatprep.subr.bf16.mxu0 0
        %475 = vmatpush1.bf16.msra.mxu0 %v451
        %476 = vmatprep.subr.bf16.mxu0 0
        %477 = vmatpush1.bf16.msra.mxu0 0
        %478 = vmatprep.subr.bf16.mxu0 0
        %479 = vmatpush1.bf16.msra.mxu0 0
        %480 = vmatprep.subr.bf16.mxu0 0
        %481 = vmatpush1.bf16.msra.mxu0 0
        %482 = vmatprep.subr.bf16.mxu0 0
        %483 = vmatpush1.bf16.msra.mxu0 0
        %484 = vmatprep.subr.bf16.mxu0 0
        %485 = vmatpush1.bf16.msra.mxu0 0
        %486 = vmatprep.subr.bf16.mxu0 0
        %487 = vmatpush1.bf16.msra.mxu0 0
        %488 = vmatprep.subr.bf16.mxu0 0
        %489 = vmatpush1.bf16.msra.mxu0 0
        %490 = vmatprep.subr.bf16.mxu0 0
        %491 = vmatpush1.bf16.msra.mxu0 0
        %492 = vmatprep.mubr.bf16.mxu0 0
        %493 = vmatmul.mubr.bf16.gmra.mrb[0].mxu0 %v396
        %v494 = vpop.f32.mrb[0].mxu0
        %v495 = vadd.f32 %v348, %v494
        %v496 = vpop.f32.mrb[0].mxu0
        %v497 = vpop.f32.mrb[0].mxu0
        %v498 = vadd.f32 %v349, %v497
        %v499 = vpop.f32.mrb[0].mxu0
        %500 = vmatprep.mubr.bf16.mxu0 0
        %501 = vmatmul.mubr.bf16.gmra.mrb[0].mxu0 %v397
        %v502 = vpop.f32.mrb[0].mxu0
        %v503 = vadd.f32 %v350, %v502
        %v504 = vpop.f32.mrb[0].mxu0
        %v505 = vpop.f32.mrb[0].mxu0
        %v506 = vadd.f32 %v351, %v505
        %v507 = vpop.f32.mrb[0].mxu0
        %508 = vmatprep.mubr.bf16.mxu0 0
        %509 = vmatmul.mubr.bf16.gmra.mrb[0].mxu0 %v398
        %v510 = vpop.f32.mrb[0].mxu0
        %v511 = vadd.f32 %v352, %v510
        %v512 = vpop.f32.mrb[0].mxu0
        %v513 = vpop.f32.mrb[0].mxu0
        %v514 = vadd.f32 %v353, %v513
        %v515 = vpop.f32.mrb[0].mxu0
        %516 = vmatprep.mubr.bf16.mxu0 0
        %517 = vmatmul.mubr.bf16.gmra.mrb[0].mxu0 %v399
        %v518 = vpop.f32.mrb[0].mxu0
        %v519 = vadd.f32 %v354, %v518
        %v520 = vpop.f32.mrb[0].mxu0
        %v521 = vpop.f32.mrb[0].mxu0
        %v522 = vadd.f32 %v355, %v521
        %v523 = vpop.f32.mrb[0].mxu0
        %524 = vmatprep.mubr.bf16.mxu0 0
        %525 = vmatmul.mubr.bf16.gmra.mrb[0].mxu0 %v400
        %v526 = vpop.f32.mrb[0].mxu0
        %v527 = vadd.f32 %v356, %v526
        %v528 = vpop.f32.mrb[0].mxu0
        %v529 = vpop.f32.mrb[0].mxu0
        %v530 = vadd.f32 %v357, %v529
        %v531 = vpop.f32.mrb[0].mxu0
        %532 = vmatprep.mubr.bf16.mxu0 0
        %533 = vmatmul.mubr.bf16.gmra.mrb[0].mxu0 %v401
        %v534 = vpop.f32.mrb[0].mxu0
        %v535 = vadd.f32 %v358, %v534
        %v536 = vpop.f32.mrb[0].mxu0
        %v537 = vpop.f32.mrb[0].mxu0
        %v538 = vadd.f32 %v359, %v537
        %v539 = vpop.f32.mrb[0].mxu0
        %540 = vmatprep.mubr.bf16.mxu0 0
        %541 = vmatmul.mubr.bf16.gmra.mrb[0].mxu0 %v402
        %v542 = vpop.f32.mrb[0].mxu0
        %v543 = vadd.f32 %v360, %v542
        %v544 = vpop.f32.mrb[0].mxu0
        %v545 = vpop.f32.mrb[0].mxu0
        %v546 = vadd.f32 %v361, %v545
        %v547 = vpop.f32.mrb[0].mxu0
        %548 = vmatprep.mubr.bf16.mxu0 0
        %549 = vmatmul.mubr.bf16.gmra.mrb[0].mxu0 %v403
        %v550 = vpop.f32.mrb[0].mxu0
        %v551 = vadd.f32 %v362, %v550
        %v552 = vpop.f32.mrb[0].mxu0
        %v553 = vpop.f32.mrb[0].mxu0
        %v554 = vadd.f32 %v363, %v553
        %v555 = vpop.f32.mrb[0].mxu0
        %556 = vdwg.mxu0
        %v557 = vpack.c.bf16 %v498, %v495
        %v558 = vpack.c.bf16 %v506, %v503
        %v559 = vpack.c.bf16 %v514, %v511
        %v560 = vpack.c.bf16 %v522, %v519
        %v561 = vpack.c.bf16 %v530, %v527
        %v562 = vpack.c.bf16 %v538, %v535
        %v563 = vpack.c.bf16 %v546, %v543
        %v564 = vpack.c.bf16 %v554, %v551
        %v565 = vld [vmem:[#allocation8] sm:$0xf]
        %v566 = vld [vmem:[#allocation8 + $0x4] sm:$0xf]
        %v567 = vld [vmem:[#allocation8 + $0x8] sm:$0xf]
        %v568 = vld [vmem:[#allocation8 + $0xc] sm:$0xf]
        %v569 = vld [vmem:[#allocation8 + $0x10] sm:$0xf]
        %v570 = vld [vmem:[#allocation8 + $0x14] sm:$0xf]
        %v571 = vld [vmem:[#allocation8 + $0x18] sm:$0xf]
        %v572 = vld [vmem:[#allocation8 + $0x1c] sm:$0xf]
        %v573 = vld [vmem:[#allocation8 + $0x20] sm:$0xf]
        %v574 = vld [vmem:[#allocation8 + $0x24] sm:$0xf]
        %v575 = vld [vmem:[#allocation8 + $0x28] sm:$0xf]
        %v576 = vld [vmem:[#allocation8 + $0x2c] sm:$0xf]
        %v577 = vld [vmem:[#allocation8 + $0x30] sm:$0xf]
        %v578 = vld [vmem:[#allocation8 + $0x34] sm:$0xf]
        %v579 = vld [vmem:[#allocation8 + $0x38] sm:$0xf]
        %v580 = vld [vmem:[#allocation8 + $0x3c] sm:$0xf]
        %v581 = vld [vmem:[%s4] sm:$0x1]
        %v583 = vlaneseq
        %v584 = vshrl.u32 %v583, 7
        %v585 = vsub.s32 0, %v584
        %v586 = vrot.slane %v581, %v585
        %v604 = vunpack.c.l.b16 %v565
        %v605 = vunpack.c.l.b16 %v566
        %v606 = vunpack.c.l.b16 %v567
        %v607 = vunpack.c.l.b16 %v568
        %v608 = vunpack.c.l.b16 %v569
        %v609 = vunpack.c.l.b16 %v570
        %v610 = vunpack.c.l.b16 %v571
        %v611 = vunpack.c.l.b16 %v572
        %v612 = vunpack.c.l.b16 %v573
        %v613 = vunpack.c.l.b16 %v574
        %v614 = vunpack.c.l.b16 %v575
        %v615 = vunpack.c.l.b16 %v576
        %v616 = vunpack.c.l.b16 %v577
        %v617 = vunpack.c.l.b16 %v578
        %v618 = vunpack.c.l.b16 %v579
        %v619 = vunpack.c.l.b16 %v580
        %v620 = vpack.c.b16 %v605, %v604
        %v621 = vpack.c.b16 %v607, %v606
        %v622 = vpack.c.b16 %v609, %v608
        %v623 = vpack.c.b16 %v611, %v610
        %v624 = vpack.c.b16 %v613, %v612
        %v625 = vpack.c.b16 %v615, %v614
        %v626 = vpack.c.b16 %v617, %v616
        %v627 = vpack.c.b16 %v619, %v618
        %636 = vmatprep.subr.bf16.mxu0 0
        %637 = vmatpush1.bf16.msra.mxu0 %v620
        %638 = vmatprep.subr.bf16.mxu0 0
        %639 = vmatpush1.bf16.msra.mxu0 %v621
        %640 = vmatprep.subr.bf16.mxu0 0
        %641 = vmatpush1.bf16.msra.mxu0 %v622
        %642 = vmatprep.subr.bf16.mxu0 0
        %643 = vmatpush1.bf16.msra.mxu0 %v623
        %644 = vmatprep.subr.bf16.mxu0 0
        %645 = vmatpush1.bf16.msra.mxu0 %v624
        %646 = vmatprep.subr.bf16.mxu0 0
        %647 = vmatpush1.bf16.msra.mxu0 %v625
        %648 = vmatprep.subr.bf16.mxu0 0
        %649 = vmatpush1.bf16.msra.mxu0 %v626
        %650 = vmatprep.subr.bf16.mxu0 0
        %651 = vmatpush1.bf16.msra.mxu0 %v627
        %652 = vmatprep.subr.bf16.mxu0 0
        %653 = vmatpush1.bf16.msra.mxu0 0
        %654 = vmatprep.subr.bf16.mxu0 0
        %655 = vmatpush1.bf16.msra.mxu0 0
        %656 = vmatprep.subr.bf16.mxu0 0
        %657 = vmatpush1.bf16.msra.mxu0 0
        %658 = vmatprep.subr.bf16.mxu0 0
        %659 = vmatpush1.bf16.msra.mxu0 0
        %660 = vmatprep.subr.bf16.mxu0 0
        %661 = vmatpush1.bf16.msra.mxu0 0
        %662 = vmatprep.subr.bf16.mxu0 0
        %663 = vmatpush1.bf16.msra.mxu0 0
        %664 = vmatprep.subr.bf16.mxu0 0
        %665 = vmatpush1.bf16.msra.mxu0 0
        %666 = vmatprep.subr.bf16.mxu0 0
        %667 = vmatpush1.bf16.msra.mxu0 0
        %668 = vmatprep.mubr.bf16.mxu0 0
        %669 = vmatmul.mubr.bf16.gmra.mrb[0].mxu0 %v557
        %v670 = vpop.f32.mrb[0].mxu0
        %v671 = vadd.f32 %v586, %v670
        %v672 = vpop.f32.mrb[0].mxu0
        %v673 = vpop.f32.mrb[0].mxu0
        %v674 = vadd.f32 %v586, %v673
        %v675 = vpop.f32.mrb[0].mxu0
        %676 = vmatprep.mubr.bf16.mxu0 0
        %677 = vmatmul.mubr.bf16.gmra.mrb[0].mxu0 %v558
        %v678 = vpop.f32.mrb[0].mxu0
        %v679 = vadd.f32 %v586, %v678
        %v680 = vpop.f32.mrb[0].mxu0
        %v681 = vpop.f32.mrb[0].mxu0
        %v682 = vadd.f32 %v586, %v681
        %v683 = vpop.f32.mrb[0].mxu0
        %684 = vmatprep.mubr.bf16.mxu0 0
        %685 = vmatmul.mubr.bf16.gmra.mrb[0].mxu0 %v559
        %v686 = vpop.f32.mrb[0].mxu0
        %v687 = vadd.f32 %v586, %v686
        %v688 = vpop.f32.mrb[0].mxu0
        %v689 = vpop.f32.mrb[0].mxu0
        %v690 = vadd.f32 %v586, %v689
        %v691 = vpop.f32.mrb[0].mxu0
        %692 = vmatprep.mubr.bf16.mxu0 0
        %693 = vmatmul.mubr.bf16.gmra.mrb[0].mxu0 %v560
        %v694 = vpop.f32.mrb[0].mxu0
        %v695 = vadd.f32 %v586, %v694
        %v696 = vpop.f32.mrb[0].mxu0
        %v697 = vpop.f32.mrb[0].mxu0
        %v698 = vadd.f32 %v586, %v697
        %v699 = vpop.f32.mrb[0].mxu0
        %700 = vmatprep.mubr.bf16.mxu0 0
        %701 = vmatmul.mubr.bf16.gmra.mrb[0].mxu0 %v561
        %v702 = vpop.f32.mrb[0].mxu0
        %v703 = vadd.f32 %v586, %v702
        %v704 = vpop.f32.mrb[0].mxu0
        %v705 = vpop.f32.mrb[0].mxu0
        %v706 = vadd.f32 %v586, %v705
        %v707 = vpop.f32.mrb[0].mxu0
        %708 = vmatprep.mubr.bf16.mxu0 0
        %709 = vmatmul.mubr.bf16.gmra.mrb[0].mxu0 %v562
        %v710 = vpop.f32.mrb[0].mxu0
        %v711 = vadd.f32 %v586, %v710
        %v712 = vpop.f32.mrb[0].mxu0
        %v713 = vpop.f32.mrb[0].mxu0
        %v714 = vadd.f32 %v586, %v713
        %v715 = vpop.f32.mrb[0].mxu0
        %716 = vmatprep.mubr.bf16.mxu0 0
        %717 = vmatmul.mubr.bf16.gmra.mrb[0].mxu0 %v563
        %v718 = vpop.f32.mrb[0].mxu0
        %v719 = vadd.f32 %v586, %v718
        %v720 = vpop.f32.mrb[0].mxu0
        %v721 = vpop.f32.mrb[0].mxu0
        %v722 = vadd.f32 %v586, %v721
        %v723 = vpop.f32.mrb[0].mxu0
        %724 = vmatprep.mubr.bf16.mxu0 0
        %725 = vmatmul.mubr.bf16.gmra.mrb[0].mxu0 %v564
        %v726 = vpop.f32.mrb[0].mxu0
        %v727 = vadd.f32 %v586, %v726
        %v728 = vpop.f32.mrb[0].mxu0
        %v729 = vpop.f32.mrb[0].mxu0
        %v730 = vadd.f32 %v586, %v729
        %v731 = vpop.f32.mrb[0].mxu0
        %732 = vdwg.mxu0
        %v733 = vmax.f32 %v671, 0.0
        %v734 = vmax.f32 %v674, 0.0
        %v735 = vmax.f32 %v679, 0.0
        %v736 = vmax.f32 %v682, 0.0
        %v737 = vmax.f32 %v687, 0.0
        %v738 = vmax.f32 %v690, 0.0
        %v739 = vmax.f32 %v695, 0.0
        %v740 = vmax.f32 %v698, 0.0
        %v741 = vmax.f32 %v703, 0.0
        %v742 = vmax.f32 %v706, 0.0
        %v743 = vmax.f32 %v711, 0.0
        %v744 = vmax.f32 %v714, 0.0
        %v745 = vmax.f32 %v719, 0.0
        %v746 = vmax.f32 %v722, 0.0
        %v747 = vmax.f32 %v727, 0.0
        %v748 = vmax.f32 %v730, 0.0
        %749 = vst [vmem:[%s311] sm:$0xff] %v733
        %750 = vst [vmem:[%s311 + $0x8] sm:$0xff] %v734
        %751 = vst [vmem:[%s311 + $0x10] sm:$0xff] %v735
        %752 = vst [vmem:[%s311 + $0x18] sm:$0xff] %v736
        %753 = vst [vmem:[%s311 + $0x20] sm:$0xff] %v737
        %754 = vst [vmem:[%s311 + $0x28] sm:$0xff] %v738
        %755 = vst [vmem:[%s311 + $0x30] sm:$0xff] %v739
        %756 = vst [vmem:[%s311 + $0x38] sm:$0xff] %v740
        %757 = vst [vmem:[%s311 + $0x40] sm:$0xff] %v741
        %758 = vst [vmem:[%s311 + $0x48] sm:$0xff] %v742
        %759 = vst [vmem:[%s311 + $0x50] sm:$0xff] %v743
        %760 = vst [vmem:[%s311 + $0x58] sm:$0xff] %v744
        %761 = vst [vmem:[%s311 + $0x60] sm:$0xff] %v745
        %762 = vst [vmem:[%s311 + $0x68] sm:$0xff] %v746
        %763 = vst [vmem:[%s311 + $0x70] sm:$0xff] %v747
        %764 = vst [vmem:[%s311 + $0x78] sm:$0xff] %v748
        %s765 = sand.u32 %s149, 1
        %s766 = scalar_lea.sflag [#allocation4], %s765
        %s767 = sand.u32 %s149, 1
        %s768 = smul.addr %s767, 128
        %s769 = scalar_lea.vmem [#allocation10], %s768
        // Predicated region
        $region57: #{tpu_custom_call.1} parent=39 // pred_check
          %p770 = pneg %p159
        $region58: #{tpu_custom_call.1} parent=39 // pred_check_branch
          %772 = sbr.rel (%p770) target = $region60
        $region59: #{tpu_custom_call.1} parent=39 // pred_region
          %s773 = smul.u32 16, %s26
          %s775 = ssub.s32 2048, 2048
          %776 = vsyncadd %s766, %s775
          %s777 = smul.addr %s773, 128
          %s778 = scalar_lea.hbm %s5, %s777
          %s779 = sshll.u32 %s769, 4
          %s780 = int_to_ptr.vmem [resolvable:$true] %s779
          %785 = dma.vmem_to_hbm [thread:$0]  %s780, 2048, %s778, %s766, 128, 128, 8
        $region60: #{tpu_custom_call.1} parent=39 // pred_fallthru
          _
      $region40: #{tpu_custom_call.1} parent=5 // pred_fallthru
        _
      %p786 = scmp.le.s32.totalorder 2, %s21
      // Predicated region
      $region61: #{tpu_custom_call.1} parent=5 // pred_check
        %p787 = pneg %p786
      $region62: #{tpu_custom_call.1} parent=5 // pred_check_branch
        %789 = sbr.rel (%p787) target = $region64
      $region63: #{tpu_custom_call.1} parent=5 // pred_region
        %s790 = ssub.s32 %s21, 2
        // Predicated region
        $region65: #{tpu_custom_call.1} parent=63 // pred_check
          %p791 = pneg %p165
        $region66: #{tpu_custom_call.1} parent=63 // pred_check_branch
          %793 = sbr.rel (%p791) target = $region68
        $region67: #{tpu_custom_call.1} parent=63 // pred_region
          %s794 = sand.u32 %s150, 1
          %s795 = scalar_lea.sflag [#allocation4], %s794
          %s796 = sand.u32 %s150, 1
          %s797 = smul.addr %s796, 128
          %s798 = scalar_lea.vmem [#allocation10], %s797
          %799 = dma.done %s795, 2048
        $region68: #{tpu_custom_call.1} parent=63 // pred_fallthru
          _
      $region64: #{tpu_custom_call.1} parent=5 // pred_fallthru
        _
    $region6: #{tpu_custom_call.1} parent=1 // loop_footer
      %s25 = sadd.s32 1, %s21
    $region7: #{tpu_custom_call.1} parent=1 // loop_footer_branch
      %20 = sbr.rel target = $region3
    $region8: #{tpu_custom_call.1} parent=1 // loop_exit
      _
    %800 = vsyncpa [#allocation3], 1
    %s801 = scalar_lea.sflag [#allocation3], 1
    %802 = vsyncpa %s801, 1
    %803 = vsyncpa [#allocation6], 1
    %s804 = scalar_lea.sflag [#allocation6], 1
    %805 = vsyncpa %s804, 1
    %806 = vsyncpa [#allocation9], 1
    %807 = vsyncpa [#allocation4], 1
    %s808 = scalar_lea.sflag [#allocation4], 1
    %809 = vsyncpa %s808, 1

</llo_original>
